<compile_context>
chip_gen: v6e
topology: v6e:2x2x1
jax: 0.10.0
libtpu: 0.0.40
codegen_flags: <defaults>
</compile_context>

<pallas_src>
import functools

import numpy as np
import jax
import jax.numpy as jnp
from jax import lax
from jax.experimental import pallas as pl
from jax.experimental.pallas import tpu as pltpu


def _round_up(x, m):
    return ((x + m - 1) // m) * m


def _frac(x):
    return x - jnp.floor(x)


def _pick_frames_per_tile(n_frames, block_size, target_samples, max_samples=1 << 18):
    """Frames per time tile.  Frames live on the lane axis -> want a multiple of 128."""
    ft = max(1, target_samples // max(1, block_size))
    if n_frames <= ft:
        # Single tile along frames; pad up to a lane-dense multiple of 128 when large.
        return _round_up(n_frames, 128) if n_frames >= 128 else n_frames
    ft = max(128, (ft // 128) * 128)
    # VMEM safety (matters for very large block_size / v7x's smaller VMEM).
    while ft > 128 and ft * block_size > max_samples:
        ft -= 128
    return ft


def _harmonic_osc_kernel(base_ref, f0c_ref, f0n_ref, ampc_ref, ampd_ref, sig_ref, *,
                         fs, block_size, level_start, n_harmonic):
    bs = block_size
    ft = base_ref.shape[-1]              # frames in this tile (lane axis)

    base = base_ref[0]                   # (1, FT) frame phase base (cycles, already mod 1)
    f0c = f0c_ref[0]                     # (1, FT) f0 of frame j
    f0n = f0n_ref[0]                     # (1, FT) f0 of frame j+1 (last frame repeated)

    # Within-frame sample index k lives on the sublane axis, so every per-sample
    # working array is (block_size, FT): fully lane dense for any block_size.
    k = lax.broadcasted_iota(jnp.int32, (bs, 1), 0).astype(jnp.float32)   # (bs, 1)
    s_tri = k * (k + 1.0) * 0.5
    coef_a = (k + 1.0 - s_tri * (1.0 / bs)) * (1.0 / fs)   # cumsum weight of f0[j]   (incl. /fs)
    coef_b = (s_tri * (1.0 / bs)) * (1.0 / fs)             # cumsum weight of f0[j+1] (incl. /fs)
    u = jnp.broadcast_to(k * (1.0 / bs), (bs, ft))         # amp interp fraction (hoisted once)

    # Closed-form inclusive cumsum of the linearly upsampled f0/fs + frame base:
    # pure broadcast FMAs on the VPU.
    # TODO(synk): torch accumulates the phase in float64; TPU has no f64, so the phase
    #             is carried in f32 with mod-1 at frame granularity to bound the drift.
    ph = base + coef_a * f0c + coef_b * f0n                # (bs, FT)
    ph = ph - jnp.floor(ph)                                # same semantics as torch `% 1`
    theta = (2.0 * np.pi) * ph

    s1 = jnp.sin(theta)
    c1 = jnp.cos(theta)
    two_c1 = c1 + c1

    # sin(n*theta) via the Chebyshev recurrence s_{n+1} = 2*cos(theta)*s_n - s_{n-1}
    # (2 VALU ops / harmonic instead of the 6-op angle-addition rotation).
    def advance(s, s_prev):
        s_next = two_c1 * s if s_prev is None else two_c1 * s - s_prev
        return s_next, s

    s, s_prev = s1, None                                   # s = sin(theta), s_prev = sin(0) = 0
    for _ in range(level_start - 1):
        s, s_prev = advance(s, s_prev)

    # Harmonic bank: amplitudes interpolated at frame resolution (never materialized
    # per-sample in HBM); Nyquist masking already folded into ampc/ampd by the wrapper.
    # TODO(synk): for very large n_harmonic (>~64) switch to lax.fori_loop(unroll=8)
    #             to bound the unrolled live ranges.
    amp = ampc_ref[0, 0:1, :] + u * ampd_ref[0, 0:1, :]    # (bs, FT)
    sig = s * amp
    for h in range(1, n_harmonic):
        s, s_prev = advance(s, s_prev)
        amp = ampc_ref[0, h:h + 1, :] + u * ampd_ref[0, h:h + 1, :]
        sig = sig + s * amp

    sig_ref[0] = sig


def harmonic_oscillator(f0_frames, amplitudes_frames, initial_phase=None, *,
                        fs, block_size, level_start=1, is_remove_above_nyquist=True,
                        target_tile_samples=65536):
    """JAX/Pallas equivalent of HarmonicOscillator.forward (oscillator = sin).

    Returns (signal (B, T), final_phase (B, 1, 1))."""
    assert level_start >= 1, "level_start < 1 not supported"
    B, L, _ = f0_frames.shape
    H = amplitudes_frames.shape[-1]
    bs = int(block_size)
    T = L * bs

    f0 = f0_frames.astype(jnp.float32)[..., 0]                  # (B, L)
    amp = amplitudes_frames.astype(jnp.float32)                 # (B, L, H)
    if initial_phase is None:
        phi0 = jnp.zeros((B,), jnp.float32)
    else:
        phi0 = initial_phase.astype(jnp.float32).reshape(B)

    # Nyquist masking at frame resolution (hoisted out of the kernel).
    if is_remove_above_nyquist:
        levels = jnp.arange(level_start, level_start + H, dtype=jnp.float32)
        aa = (f0[..., None] * levels < fs / 2.0).astype(jnp.float32) + 1e-4
        amp = amp * aa

    # Next-frame (last repeated) copies used by the linear interpolation.
    f0n = jnp.concatenate([f0[:, 1:], f0[:, -1:]], axis=1)                # (B, L)
    ampd = jnp.concatenate([amp[:, 1:], amp[:, -1:]], axis=1) - amp       # (B, L, H)

    # Frame-level phase bases (cycles): exclusive prefix sum over frames of
    #   D[j] = sum_k f0_up[j*bs+k]/fs = ((bs+1)/2*f0[j] + (bs-1)/2*f0[j+1]) / fs.
    # Phase only matters mod 1, so the scan uses mod-1 addition: every partial stays
    # in [0,1) -> f32 error bounded for any sequence length (compensated-sum concern).
    d = ((bs + 1) * 0.5 * f0 + (bs - 1) * 0.5 * f0n) * (1.0 / fs)         # (B, L)
    dfrac = _frac(d)
    csum = lax.associative_scan(lambda a, b: _frac(a + b), dfrac, axis=1)  # inclusive
    phi0f = _frac(phi0)[:, None]                                           # (B, 1)
    base = _frac(phi0f + jnp.concatenate(
        [jnp.zeros((B, 1), jnp.float32), csum[:, :-1]], axis=1))           # (B, L)

    # Final phase of the whole sequence (closed form) -> no revisited output block in
    # the kernel, so both grid axes can be "parallel" (uses v7x's second TensorCore).
    final_phase = ((2.0 * np.pi) * _frac(phi0f + csum[:, -1:])).reshape(B, 1, 1)

    # Tile the frame axis; pad with edge frames so every tile is full and lane dense.
    FT = _pick_frames_per_tile(L, bs, int(target_tile_samples))
    NT = pl.cdiv(L, FT)
    Lp = NT * FT
    pad = Lp - L

    def _pad_frames(x):
        if pad == 0:
            return x
        cfg = ((0, 0), (0, pad)) + ((0, 0),) * (x.ndim - 2)
        return jnp.pad(x, cfg, mode="edge")

    base_p = _pad_frames(base)[:, None, :]                                 # (B, 1, Lp)
    f0_p = _pad_frames(f0)[:, None, :]                                     # (B, 1, Lp)
    f0n_p = _pad_frames(f0n)[:, None, :]                                   # (B, 1, Lp)
    ampc_p = jnp.transpose(_pad_frames(amp), (0, 2, 1))                    # (B, H, Lp)
    ampd_p = jnp.transpose(_pad_frames(ampd), (0, 2, 1))                   # (B, H, Lp)

    kernel = functools.partial(
        _harmonic_osc_kernel, fs=float(fs), block_size=bs,
        level_start=int(level_start), n_harmonic=H)

    sig = pl.pallas_call(
        kernel,
        grid=(B, NT),
        in_specs=[
            pl.BlockSpec((1, 1, FT), lambda b, t: (b, 0, t)),    # frame phase base
            pl.BlockSpec((1, 1, FT), lambda b, t: (b, 0, t)),    # f0 (frame j)
            pl.BlockSpec((1, 1, FT), lambda b, t: (b, 0, t)),    # f0 (frame j+1)
            pl.BlockSpec((1, H, FT), lambda b, t: (b, 0, t)),    # amp (frame j, masked)
            pl.BlockSpec((1, H, FT), lambda b, t: (b, 0, t)),    # amp delta (masked)
        ],
        out_specs=pl.BlockSpec((1, bs, FT), lambda b, t: (b, 0, t)),
        out_shape=jax.ShapeDtypeStruct((B, bs, Lp), jnp.float32),
        compiler_params=pltpu.CompilerParams(
            dimension_semantics=("parallel", "parallel")),
    )(base_p, f0_p, f0n_p, ampc_p, ampd_p)

    # Kernel layout is (within-frame sample k, frame) so every store is lane dense;
    # restore natural (frame, k) sample order with one cheap XLA transpose and drop
    # the frame padding.
    signal = jnp.transpose(sig, (0, 2, 1)).reshape(B, Lp * bs)[:, :T]
    return signal, final_phase


def _reference(f0_frames, amp_frames, initial_phase, *, fs, block_size,
               level_start, remove_nyquist):
    """NumPy float64 reference mirroring the PyTorch (double-precision phase) semantics."""
    f0 = np.asarray(f0_frames, np.float64)            # (B, L, 1)
    amp = np.asarray(amp_frames, np.float64)          # (B, L, H)
    phi0 = np.asarray(initial_phase, np.float64)      # (B, 1, 1)
    B, L, _ = f0.shape
    H = amp.shape[-1]
    T = L * block_size
    level = np.arange(level_start, level_start + H, dtype=np.float64)

    if remove_nyquist:
        aa = (f0 * level < fs / 2.0).astype(np.float64) + 1e-4
        amp = amp * aa

    def upsample(x):  # (B, L, C) -> (B, T, C), linear, align_corners, last frame repeated
        x_ext = np.concatenate([x, x[:, -1:, :]], axis=1)
        t = np.arange(T)
        j = t // block_size
        frac = (t % block_size).astype(np.float64) / block_size
        return (x_ext[:, j, :] * (1.0 - frac)[None, :, None]
                + x_ext[:, j + 1, :] * frac[None, :, None])

    f0_up = upsample(f0)                                                   # (B, T, 1)
    phase = 2.0 * np.pi * ((np.cumsum(f0_up / fs, axis=1) + phi0) % 1.0)
    amp_up = upsample(amp)                                                 # (B, T, H)
    signal = np.sum(np.sin(phase * level) * amp_up, axis=-1)               # (B, T)
    final_phase = phase[:, -1:, :]                                         # (B, 1, 1)
    return signal.astype(np.float32), final_phase.astype(np.float32)


if __name__ == "__main__":
    key = jax.random.PRNGKey(0)
    k1, k2, k3, k4, k5 = jax.random.split(key, 5)

    # Case 1: small shapes matching the module's expected inputs.
    B, L, H = 2, 8, 8
    fs, block_size, level_start = 16000, 16, 1
    f0_frames = jax.random.uniform(k1, (B, L, 1), minval=200.0, maxval=1500.0)
    amp_frames = jax.random.uniform(k2, (B, L, H), minval=0.0, maxval=1.0)
    initial_phase = jax.random.uniform(k3, (B, 1, 1), minval=0.0, maxval=1.0)

    signal, final_phase = harmonic_oscillator(
        f0_frames, amp_frames, initial_phase,
        fs=fs, block_size=block_size, level_start=level_start,
        is_remove_above_nyquist=True)
    jax.block_until_ready((signal, final_phase))

    ref_sig, ref_fph = _reference(
        f0_frames, amp_frames, initial_phase, fs=fs, block_size=block_size,
        level_start=level_start, remove_nyquist=True)
    np.testing.assert_allclose(np.asarray(signal), ref_sig, rtol=1e-2, atol=1e-2)
    np.testing.assert_allclose(np.asarray(final_phase), ref_fph, rtol=1e-2, atol=1e-2)

    # Case 2: multi-tile grid + frame padding + level_start > 1 + no initial phase.
    B2, L2, H2 = 1, 333, 5
    fs2, bs2, ls2 = 24000, 16, 2
    f0_2 = jax.random.uniform(k4, (B2, L2, 1), minval=100.0, maxval=2000.0)
    amp_2 = jax.random.uniform(k5, (B2, L2, H2), minval=0.0, maxval=1.0)

    sig2, fph2 = harmonic_oscillator(
        f0_2, amp_2, None, fs=fs2, block_size=bs2, level_start=ls2,
        is_remove_above_nyquist=True, target_tile_samples=2048)
    jax.block_until_ready((sig2, fph2))

    ref_sig2, ref_fph2 = _reference(
        f0_2, amp_2, np.zeros((B2, 1, 1), np.float64), fs=fs2, block_size=bs2,
        level_start=ls2, remove_nyquist=True)
    np.testing.assert_allclose(np.asarray(sig2), ref_sig2, rtol=1e-2, atol=1e-2)
    np.testing.assert_allclose(np.asarray(fph2), ref_fph2, rtol=1e-2, atol=1e-2)

    print("KERNEL_OK")
</pallas_src>

<mosaic_0001>
module attributes {stable_mosaic.version = 11 : i64} {
  func.func @_harmonic_osc_kernel(%arg0: i32, %arg1: i32, %arg2: memref<1x1x8xf32, #tpu.memory_space<vmem>>, %arg3: memref<1x1x8xf32, #tpu.memory_space<vmem>>, %arg4: memref<1x1x8xf32, #tpu.memory_space<vmem>>, %arg5: memref<1x8x8xf32, #tpu.memory_space<vmem>>, %arg6: memref<1x8x8xf32, #tpu.memory_space<vmem>>, %arg7: memref<1x16x8xf32, #tpu.memory_space<vmem>>) attributes {dimension_semantics = [#tpu.dimension_semantics<parallel>, #tpu.dimension_semantics<parallel>], iteration_bounds = array<i64: 2, 1>, scalar_prefetch = 0 : i64, scratch_operands = 0 : i64, tpu.core_type = #tpu.core_type<tc>, window_params = [{transform_indices = @transform_0, window_bounds = array<i64: 1, 1, 8>}, {transform_indices = @transform_1, window_bounds = array<i64: 1, 1, 8>}, {transform_indices = @transform_2, window_bounds = array<i64: 1, 1, 8>}, {transform_indices = @transform_3, window_bounds = array<i64: 1, 8, 8>}, {transform_indices = @transform_4, window_bounds = array<i64: 1, 8, 8>}, {transform_indices = @transform_5, window_bounds = array<i64: 1, 16, 8>}]} {
    %c0 = arith.constant 0 : index
    %c0_0 = arith.constant 0 : index
    %c0_1 = arith.constant 0 : index
    %0 = vector.load %arg2[%c0, %c0_0, %c0_1] : memref<1x1x8xf32, #tpu.memory_space<vmem>>, vector<1x1x8xf32>
    %1 = vector.shape_cast %0 : vector<1x1x8xf32> to vector<1x8xf32>
    %c0_2 = arith.constant 0 : index
    %c0_3 = arith.constant 0 : index
    %c0_4 = arith.constant 0 : index
    %2 = vector.load %arg3[%c0_2, %c0_3, %c0_4] : memref<1x1x8xf32, #tpu.memory_space<vmem>>, vector<1x1x8xf32>
    %3 = vector.shape_cast %2 : vector<1x1x8xf32> to vector<1x8xf32>
    %c0_5 = arith.constant 0 : index
    %c0_6 = arith.constant 0 : index
    %c0_7 = arith.constant 0 : index
    %4 = vector.load %arg4[%c0_5, %c0_6, %c0_7] : memref<1x1x8xf32, #tpu.memory_space<vmem>>, vector<1x1x8xf32>
    %5 = vector.shape_cast %4 : vector<1x1x8xf32> to vector<1x8xf32>
    %6 = tpu.iota {dimensions = array<i32: 0>} : vector<16x1xi32>
    %7 = arith.sitofp %6 : vector<16x1xi32> to vector<16x1xf32>
    %cst = arith.constant 1.000000e+00 : f32
    %8 = vector.broadcast %cst : f32 to vector<16x1xf32>
    %9 = arith.addf %7, %8 : vector<16x1xf32>
    %10 = arith.mulf %7, %9 : vector<16x1xf32>
    %cst_8 = arith.constant 5.000000e-01 : f32
    %11 = vector.broadcast %cst_8 : f32 to vector<16x1xf32>
    %12 = arith.mulf %10, %11 : vector<16x1xf32>
    %cst_9 = arith.constant 1.000000e+00 : f32
    %13 = vector.broadcast %cst_9 : f32 to vector<16x1xf32>
    %14 = arith.addf %7, %13 : vector<16x1xf32>
    %cst_10 = arith.constant 6.250000e-02 : f32
    %15 = vector.broadcast %cst_10 : f32 to vector<16x1xf32>
    %16 = arith.mulf %12, %15 : vector<16x1xf32>
    %17 = arith.subf %14, %16 : vector<16x1xf32>
    %cst_11 = arith.constant 6.250000e-05 : f32
    %18 = vector.broadcast %cst_11 : f32 to vector<16x1xf32>
    %19 = arith.mulf %17, %18 : vector<16x1xf32>
    %cst_12 = arith.constant 6.250000e-02 : f32
    %20 = vector.broadcast %cst_12 : f32 to vector<16x1xf32>
    %21 = arith.mulf %12, %20 : vector<16x1xf32>
    %cst_13 = arith.constant 6.250000e-05 : f32
    %22 = vector.broadcast %cst_13 : f32 to vector<16x1xf32>
    %23 = arith.mulf %21, %22 : vector<16x1xf32>
    %cst_14 = arith.constant 6.250000e-02 : f32
    %24 = vector.broadcast %cst_14 : f32 to vector<16x1xf32>
    %25 = arith.mulf %7, %24 : vector<16x1xf32>
    %26 = vector.shape_cast %25 : vector<16x1xf32> to vector<16x1xf32>
    %27 = vector.broadcast %26 : vector<16x1xf32> to vector<16x8xf32>
    %28 = vector.broadcast %19 : vector<16x1xf32> to vector<16x8xf32>
    %29 = vector.broadcast %3 : vector<1x8xf32> to vector<16x8xf32>
    %30 = arith.mulf %28, %29 : vector<16x8xf32>
    %31 = vector.broadcast %1 : vector<1x8xf32> to vector<16x8xf32>
    %32 = arith.addf %31, %30 : vector<16x8xf32>
    %33 = vector.broadcast %23 : vector<16x1xf32> to vector<16x8xf32>
    %34 = vector.broadcast %5 : vector<1x8xf32> to vector<16x8xf32>
    %35 = arith.mulf %33, %34 : vector<16x8xf32>
    %36 = arith.addf %32, %35 : vector<16x8xf32>
    %37 = math.floor %36 : vector<16x8xf32>
    %38 = arith.subf %36, %37 : vector<16x8xf32>
    %cst_15 = arith.constant 6.28318548 : f32
    %39 = vector.broadcast %cst_15 : f32 to vector<16x8xf32>
    %40 = arith.mulf %39, %38 : vector<16x8xf32>
    %41 = math.sin %40 : vector<16x8xf32>
    %42 = math.cos %40 : vector<16x8xf32>
    %43 = arith.addf %42, %42 : vector<16x8xf32>
    %c0_16 = arith.constant 0 : index
    %c0_17 = arith.constant 0 : index
    %c0_18 = arith.constant 0 : index
    %44 = vector.load %arg5[%c0_16, %c0_17, %c0_18] : memref<1x8x8xf32, #tpu.memory_space<vmem>>, vector<1x1x8xf32>
    %45 = vector.shape_cast %44 : vector<1x1x8xf32> to vector<1x8xf32>
    %c0_19 = arith.constant 0 : index
    %c0_20 = arith.constant 0 : index
    %c0_21 = arith.constant 0 : index
    %46 = vector.load %arg6[%c0_19, %c0_20, %c0_21] : memref<1x8x8xf32, #tpu.memory_space<vmem>>, vector<1x1x8xf32>
    %47 = vector.shape_cast %46 : vector<1x1x8xf32> to vector<1x8xf32>
    %48 = vector.broadcast %47 : vector<1x8xf32> to vector<16x8xf32>
    %49 = arith.mulf %27, %48 : vector<16x8xf32>
    %50 = vector.broadcast %45 : vector<1x8xf32> to vector<16x8xf32>
    %51 = arith.addf %50, %49 : vector<16x8xf32>
    %52 = arith.mulf %41, %51 : vector<16x8xf32>
    %53 = arith.mulf %43, %41 : vector<16x8xf32>
    %c0_22 = arith.constant 0 : index
    %c1 = arith.constant 1 : index
    %c0_23 = arith.constant 0 : index
    %54 = vector.load %arg5[%c0_22, %c1, %c0_23] : memref<1x8x8xf32, #tpu.memory_space<vmem>>, vector<1x1x8xf32>
    %55 = vector.shape_cast %54 : vector<1x1x8xf32> to vector<1x8xf32>
    %c0_24 = arith.constant 0 : index
    %c1_25 = arith.constant 1 : index
    %c0_26 = arith.constant 0 : index
    %56 = vector.load %arg6[%c0_24, %c1_25, %c0_26] : memref<1x8x8xf32, #tpu.memory_space<vmem>>, vector<1x1x8xf32>
    %57 = vector.shape_cast %56 : vector<1x1x8xf32> to vector<1x8xf32>
    %58 = vector.broadcast %57 : vector<1x8xf32> to vector<16x8xf32>
    %59 = arith.mulf %27, %58 : vector<16x8xf32>
    %60 = vector.broadcast %55 : vector<1x8xf32> to vector<16x8xf32>
    %61 = arith.addf %60, %59 : vector<16x8xf32>
    %62 = arith.mulf %53, %61 : vector<16x8xf32>
    %63 = arith.addf %52, %62 : vector<16x8xf32>
    %64 = arith.mulf %43, %53 : vector<16x8xf32>
    %65 = arith.subf %64, %41 : vector<16x8xf32>
    %c0_27 = arith.constant 0 : index
    %c2 = arith.constant 2 : index
    %c0_28 = arith.constant 0 : index
    %66 = vector.load %arg5[%c0_27, %c2, %c0_28] : memref<1x8x8xf32, #tpu.memory_space<vmem>>, vector<1x1x8xf32>
    %67 = vector.shape_cast %66 : vector<1x1x8xf32> to vector<1x8xf32>
    %c0_29 = arith.constant 0 : index
    %c2_30 = arith.constant 2 : index
    %c0_31 = arith.constant 0 : index
    %68 = vector.load %arg6[%c0_29, %c2_30, %c0_31] : memref<1x8x8xf32, #tpu.memory_space<vmem>>, vector<1x1x8xf32>
    %69 = vector.shape_cast %68 : vector<1x1x8xf32> to vector<1x8xf32>
    %70 = vector.broadcast %69 : vector<1x8xf32> to vector<16x8xf32>
    %71 = arith.mulf %27, %70 : vector<16x8xf32>
    %72 = vector.broadcast %67 : vector<1x8xf32> to vector<16x8xf32>
    %73 = arith.addf %72, %71 : vector<16x8xf32>
    %74 = arith.mulf %65, %73 : vector<16x8xf32>
    %75 = arith.addf %63, %74 : vector<16x8xf32>
    %76 = arith.mulf %43, %65 : vector<16x8xf32>
    %77 = arith.subf %76, %53 : vector<16x8xf32>
    %c0_32 = arith.constant 0 : index
    %c3 = arith.constant 3 : index
    %c0_33 = arith.constant 0 : index
    %78 = vector.load %arg5[%c0_32, %c3, %c0_33] : memref<1x8x8xf32, #tpu.memory_space<vmem>>, vector<1x1x8xf32>
    %79 = vector.shape_cast %78 : vector<1x1x8xf32> to vector<1x8xf32>
    %c0_34 = arith.constant 0 : index
    %c3_35 = arith.constant 3 : index
    %c0_36 = arith.constant 0 : index
    %80 = vector.load %arg6[%c0_34, %c3_35, %c0_36] : memref<1x8x8xf32, #tpu.memory_space<vmem>>, vector<1x1x8xf32>
    %81 = vector.shape_cast %80 : vector<1x1x8xf32> to vector<1x8xf32>
    %82 = vector.broadcast %81 : vector<1x8xf32> to vector<16x8xf32>
    %83 = arith.mulf %27, %82 : vector<16x8xf32>
    %84 = vector.broadcast %79 : vector<1x8xf32> to vector<16x8xf32>
    %85 = arith.addf %84, %83 : vector<16x8xf32>
    %86 = arith.mulf %77, %85 : vector<16x8xf32>
    %87 = arith.addf %75, %86 : vector<16x8xf32>
    %88 = arith.mulf %43, %77 : vector<16x8xf32>
    %89 = arith.subf %88, %65 : vector<16x8xf32>
    %c0_37 = arith.constant 0 : index
    %c4 = arith.constant 4 : index
    %c0_38 = arith.constant 0 : index
    %90 = vector.load %arg5[%c0_37, %c4, %c0_38] : memref<1x8x8xf32, #tpu.memory_space<vmem>>, vector<1x1x8xf32>
    %91 = vector.shape_cast %90 : vector<1x1x8xf32> to vector<1x8xf32>
    %c0_39 = arith.constant 0 : index
    %c4_40 = arith.constant 4 : index
    %c0_41 = arith.constant 0 : index
    %92 = vector.load %arg6[%c0_39, %c4_40, %c0_41] : memref<1x8x8xf32, #tpu.memory_space<vmem>>, vector<1x1x8xf32>
    %93 = vector.shape_cast %92 : vector<1x1x8xf32> to vector<1x8xf32>
    %94 = vector.broadcast %93 : vector<1x8xf32> to vector<16x8xf32>
    %95 = arith.mulf %27, %94 : vector<16x8xf32>
    %96 = vector.broadcast %91 : vector<1x8xf32> to vector<16x8xf32>
    %97 = arith.addf %96, %95 : vector<16x8xf32>
    %98 = arith.mulf %89, %97 : vector<16x8xf32>
    %99 = arith.addf %87, %98 : vector<16x8xf32>
    %100 = arith.mulf %43, %89 : vector<16x8xf32>
    %101 = arith.subf %100, %77 : vector<16x8xf32>
    %c0_42 = arith.constant 0 : index
    %c5 = arith.constant 5 : index
    %c0_43 = arith.constant 0 : index
    %102 = vector.load %arg5[%c0_42, %c5, %c0_43] : memref<1x8x8xf32, #tpu.memory_space<vmem>>, vector<1x1x8xf32>
    %103 = vector.shape_cast %102 : vector<1x1x8xf32> to vector<1x8xf32>
    %c0_44 = arith.constant 0 : index
    %c5_45 = arith.constant 5 : index
    %c0_46 = arith.constant 0 : index
    %104 = vector.load %arg6[%c0_44, %c5_45, %c0_46] : memref<1x8x8xf32, #tpu.memory_space<vmem>>, vector<1x1x8xf32>
    %105 = vector.shape_cast %104 : vector<1x1x8xf32> to vector<1x8xf32>
    %106 = vector.broadcast %105 : vector<1x8xf32> to vector<16x8xf32>
    %107 = arith.mulf %27, %106 : vector<16x8xf32>
    %108 = vector.broadcast %103 : vector<1x8xf32> to vector<16x8xf32>
    %109 = arith.addf %108, %107 : vector<16x8xf32>
    %110 = arith.mulf %101, %109 : vector<16x8xf32>
    %111 = arith.addf %99, %110 : vector<16x8xf32>
    %112 = arith.mulf %43, %101 : vector<16x8xf32>
    %113 = arith.subf %112, %89 : vector<16x8xf32>
    %c0_47 = arith.constant 0 : index
    %c6 = arith.constant 6 : index
    %c0_48 = arith.constant 0 : index
    %114 = vector.load %arg5[%c0_47, %c6, %c0_48] : memref<1x8x8xf32, #tpu.memory_space<vmem>>, vector<1x1x8xf32>
    %115 = vector.shape_cast %114 : vector<1x1x8xf32> to vector<1x8xf32>
    %c0_49 = arith.constant 0 : index
    %c6_50 = arith.constant 6 : index
    %c0_51 = arith.constant 0 : index
    %116 = vector.load %arg6[%c0_49, %c6_50, %c0_51] : memref<1x8x8xf32, #tpu.memory_space<vmem>>, vector<1x1x8xf32>
    %117 = vector.shape_cast %116 : vector<1x1x8xf32> to vector<1x8xf32>
    %118 = vector.broadcast %117 : vector<1x8xf32> to vector<16x8xf32>
    %119 = arith.mulf %27, %118 : vector<16x8xf32>
    %120 = vector.broadcast %115 : vector<1x8xf32> to vector<16x8xf32>
    %121 = arith.addf %120, %119 : vector<16x8xf32>
    %122 = arith.mulf %113, %121 : vector<16x8xf32>
    %123 = arith.addf %111, %122 : vector<16x8xf32>
    %124 = arith.mulf %43, %113 : vector<16x8xf32>
    %125 = arith.subf %124, %101 : vector<16x8xf32>
    %c0_52 = arith.constant 0 : index
    %c7 = arith.constant 7 : index
    %c0_53 = arith.constant 0 : index
    %126 = vector.load %arg5[%c0_52, %c7, %c0_53] : memref<1x8x8xf32, #tpu.memory_space<vmem>>, vector<1x1x8xf32>
    %127 = vector.shape_cast %126 : vector<1x1x8xf32> to vector<1x8xf32>
    %c0_54 = arith.constant 0 : index
    %c7_55 = arith.constant 7 : index
    %c0_56 = arith.constant 0 : index
    %128 = vector.load %arg6[%c0_54, %c7_55, %c0_56] : memref<1x8x8xf32, #tpu.memory_space<vmem>>, vector<1x1x8xf32>
    %129 = vector.shape_cast %128 : vector<1x1x8xf32> to vector<1x8xf32>
    %130 = vector.broadcast %129 : vector<1x8xf32> to vector<16x8xf32>
    %131 = arith.mulf %27, %130 : vector<16x8xf32>
    %132 = vector.broadcast %127 : vector<1x8xf32> to vector<16x8xf32>
    %133 = arith.addf %132, %131 : vector<16x8xf32>
    %134 = arith.mulf %125, %133 : vector<16x8xf32>
    %135 = arith.addf %123, %134 : vector<16x8xf32>
    %c0_57 = arith.constant 0 : index
    %c0_58 = arith.constant 0 : index
    %c0_59 = arith.constant 0 : index
    %136 = vector.load %arg7[%c0_57, %c0_58, %c0_59] : memref<1x16x8xf32, #tpu.memory_space<vmem>>, vector<1x16x8xf32>
    %137 = vector.shape_cast %136 : vector<1x16x8xf32> to vector<16x8xf32>
    %138 = vector.shape_cast %135 : vector<16x8xf32> to vector<1x16x8xf32>
    tpu.vector_store %arg7[%c0_57, %c0_58, %c0_59], %138 {strides = array<i32>} : memref<1x16x8xf32, #tpu.memory_space<vmem>>, vector<1x16x8xf32>,
    return
  }
  func.func @transform_0(%arg0: i32, %arg1: i32) -> (i32, i32, i32) {
    %c0_i32 = arith.constant 0 : i32
    %c0_i32_0 = arith.constant 0 : i32
    return %arg0, %c0_i32, %arg1 : i32, i32, i32
  }
  func.func @transform_1(%arg0: i32, %arg1: i32) -> (i32, i32, i32) {
    %c0_i32 = arith.constant 0 : i32
    %c0_i32_0 = arith.constant 0 : i32
    return %arg0, %c0_i32, %arg1 : i32, i32, i32
  }
  func.func @transform_2(%arg0: i32, %arg1: i32) -> (i32, i32, i32) {
    %c0_i32 = arith.constant 0 : i32
    %c0_i32_0 = arith.constant 0 : i32
    return %arg0, %c0_i32, %arg1 : i32, i32, i32
  }
  func.func @transform_3(%arg0: i32, %arg1: i32) -> (i32, i32, i32) {
    %c0_i32 = arith.constant 0 : i32
    %c0_i32_0 = arith.constant 0 : i32
    return %arg0, %c0_i32, %arg1 : i32, i32, i32
  }
  func.func @transform_4(%arg0: i32, %arg1: i32) -> (i32, i32, i32) {
    %c0_i32 = arith.constant 0 : i32
    %c0_i32_0 = arith.constant 0 : i32
    return %arg0, %c0_i32, %arg1 : i32, i32, i32
  }
  func.func @transform_5(%arg0: i32, %arg1: i32) -> (i32, i32, i32) {
    %c0_i32 = arith.constant 0 : i32
    %c0_i32_0 = arith.constant 0 : i32
    return %arg0, %c0_i32, %arg1 : i32, i32, i32
  }
}

</mosaic_0001>

<llo_original>
// kernel: tpu_custom_call.1
$region0: #{tpu_custom_call.1}
  #allocation0 [shape = 'u32[]', space=smem, size = 0x4, offset = 0x4, fixed_abs, tag = 'smem constant byte address 0x4 - core index']
  #allocation1 [shape = 'u32[144,128]{1,0:T(1,128)}', space=vmem, size = 0x12000, scoped, tag = 'internal scratch']
  %s0 = inlined_call_operand.hbm [shape: f32[2,1,8], index: 0, kind: input, shape index: {}]
  %s1 = inlined_call_operand.hbm [shape: f32[2,1,8], index: 1, kind: input, shape index: {}]
  %s2 = inlined_call_operand.vmem [shape: f32[2,1,8], index: 2, kind: input, shape index: {}]
  %s3 = inlined_call_operand.hbm [shape: f32[2,8,8], index: 3, kind: input, shape index: {}]
  %s4 = inlined_call_operand.hbm [shape: f32[2,8,8], index: 4, kind: input, shape index: {}]
  %s5 = inlined_call_operand.vmem [shape: f32[2,16,8], index: 5, kind: output, shape index: {}]
  %s6 = sld [smem:[#allocation0]]
  $region69: #{tpu_custom_call.1} parent=0
    _
  %s8 = ssub.s32 1, %s6
  %s9 = scalar_select 0, %s8, %s6
  $region1: #{tpu_custom_call.1} parent=0
    #allocation2 [shape = 'u8[1024]{0}', space=vmem, size = 0x400, scoped, tag = 'input window, operand 0']
    #allocation3 [shape = 's32[2]{0}', space=sflag, size = 0x8, scoped, tag = 'scoped memory for tpu_custom_call.1']
    #allocation4 [shape = 'u8[1024]{0}', space=vmem, size = 0x400, scoped, tag = 'input window, operand 1']
    #allocation5 [shape = 's32[2]{0}', space=sflag, size = 0x8, scoped, tag = 'scoped memory for tpu_custom_call.1']
    #allocation6 [shape = 'u8[8192]{0}', space=vmem, size = 0x2000, scoped, tag = 'input window, operand 3']
    #allocation7 [shape = 'u8[8192]{0}', space=vmem, size = 0x2000, scoped, tag = 'input window, operand 4']
    #allocation8 [shape = 's32[2]{0}', space=sflag, size = 0x8, scoped, tag = 'scoped memory for tpu_custom_call.1']
    %10 = vsyncpa [#allocation3], 0
    %s11 = scalar_lea.sflag [#allocation3], 1
    %12 = vsyncpa %s11, 0
    %13 = vsyncpa [#allocation5], 0
    %s14 = scalar_lea.sflag [#allocation5], 1
    %15 = vsyncpa %s14, 0
    %16 = vsyncpa [#allocation8], 0
    %s17 = scalar_lea.sflag [#allocation8], 1
    %18 = vsyncpa %s17, 0
    loop: start=0, step=1, limit=4
    $region2: #{tpu_custom_call.1} parent=1 // loop_pre_header
      _
    $region3: #{tpu_custom_call.1} parent=1 // loop_header
      %s20 = sphi 0, %s24
      %p21 = scmp.ge.s32.totalorder %s20, 4
      %s27 = sphi 0, %s39
      %s28 = sphi 0, %s35
      %s29 = sphi 0, %s27
      %s30 = sphi 0, %s28
      %s31 = sphi 0, %s29
      %s32 = sphi 0, %s30
      %s44 = sphi 0, %s46
      %s47 = sphi 0, %s44
      %s48 = sphi 0, %s47
      %s64 = sphi 0, %s48
      %s72 = sphi 0, %s74
      %s75 = sphi 0, %s72
      %s76 = sphi 0, %s75
      %s92 = sphi 0, %s76
      %s100 = sphi 0, %s102
      %s103 = sphi 0, %s100
      %s104 = sphi 0, %s103
      %s120 = sphi 0, %s104
      %s128 = sphi 0, %s130
      %s131 = sphi 0, %s128
      %s132 = sphi 0, %s131
      %s148 = sphi 0, %s132
      %s156 = sphi 0, %s158
      %s159 = sphi 0, %s156
      %s160 = sphi 0, %s159
      %s176 = sphi 0, %s160
      %s184 = sphi 0, %s186
      %s187 = sphi 0, %s184
      %s188 = sphi 0, %s187
      %s204 = sphi 0, %s188
    $region4: #{tpu_custom_call.1} parent=1 // loop_header_branch
      %23 = sbr.rel (%p21) target = $region8
    $region5: #{tpu_custom_call.1} parent=1 // loop_body
      %s25 = ssub.s32 %s20, 1
      %s26 = ssub.s32 %s20, 2
      %s33 = sadd.s32 1, %s28
      %p34 = scmp.ge.s32.totalorder %s33, 1
      %s35 = scalar_select %p34, 0, %s33
      %s36 = sadd.s32 1, %s27
      %s37 = scalar_select %p34, %s36, %s27
      %p38 = scmp.ge.s32.totalorder %s37, 2
      %s39 = scalar_select %p38, 0, %s37
      %s40 = ssub.s32 %s27, %s39
      %s41 = ssub.s32 %s28, %s35
      %s42 = sor.u32 %s40, %s41
      %p43 = scmp.eq.s32.totalorder %s42, 0
      %s45 = sadd.s32 %s44, 1
      %s46 = scalar_select %p43, %s44, %s45
      %p49 = pneg %p43
      %p50 = scmp.eq.s32.totalorder %s20, 1
      %p51 = por %p49, %p50
      %p52 = scmp.ne.s32.totalorder %s44, %s47
      %p53 = scmp.eq.s32.totalorder %s20, 0
      %p54 = por %p52, %p53
      %p55 = scmp.ne.s32.totalorder %s44, %s47
      %p56 = scmp.eq.s32.totalorder %s25, 1
      %p57 = por %p55, %p56
      %p58 = scmp.ne.s32.totalorder %s47, %s48
      %p59 = scmp.eq.s32.totalorder %s25, 0
      %p60 = por %p58, %p59
      %p61 = scmp.ne.s32.totalorder %s47, %s48
      %p62 = scmp.eq.s32.totalorder %s26, 1
      %p63 = por %p61, %p62
      %p65 = scmp.ne.s32.totalorder %s48, %s64
      %p66 = scmp.eq.s32.totalorder %s26, 0
      %p67 = por %p65, %p66
      %s68 = ssub.s32 %s27, %s39
      %s69 = ssub.s32 %s28, %s35
      %s70 = sor.u32 %s68, %s69
      %p71 = scmp.eq.s32.totalorder %s70, 0
      %s73 = sadd.s32 %s72, 1
      %s74 = scalar_select %p71, %s72, %s73
      %p77 = pneg %p71
      %p78 = scmp.eq.s32.totalorder %s20, 1
      %p79 = por %p77, %p78
      %p80 = scmp.ne.s32.totalorder %s72, %s75
      %p81 = scmp.eq.s32.totalorder %s20, 0
      %p82 = por %p80, %p81
      %p83 = scmp.ne.s32.totalorder %s72, %s75
      %p84 = scmp.eq.s32.totalorder %s25, 1
      %p85 = por %p83, %p84
      %p86 = scmp.ne.s32.totalorder %s75, %s76
      %p87 = scmp.eq.s32.totalorder %s25, 0
      %p88 = por %p86, %p87
      %p89 = scmp.ne.s32.totalorder %s75, %s76
      %p90 = scmp.eq.s32.totalorder %s26, 1
      %p91 = por %p89, %p90
      %p93 = scmp.ne.s32.totalorder %s76, %s92
      %p94 = scmp.eq.s32.totalorder %s26, 0
      %p95 = por %p93, %p94
      %s96 = ssub.s32 %s27, %s39
      %s97 = ssub.s32 %s28, %s35
      %s98 = sor.u32 %s96, %s97
      %p99 = scmp.eq.s32.totalorder %s98, 0
      %s101 = sadd.s32 %s100, 1
      %s102 = scalar_select %p99, %s100, %s101
      %p105 = pneg %p99
      %p106 = scmp.eq.s32.totalorder %s20, 1
      %p107 = por %p105, %p106
      %p108 = scmp.ne.s32.totalorder %s100, %s103
      %p109 = scmp.eq.s32.totalorder %s20, 0
      %p110 = por %p108, %p109
      %p111 = scmp.ne.s32.totalorder %s100, %s103
      %p112 = scmp.eq.s32.totalorder %s25, 1
      %p113 = por %p111, %p112
      %p114 = scmp.ne.s32.totalorder %s103, %s104
      %p115 = scmp.eq.s32.totalorder %s25, 0
      %p116 = por %p114, %p115
      %p117 = scmp.ne.s32.totalorder %s103, %s104
      %p118 = scmp.eq.s32.totalorder %s26, 1
      %p119 = por %p117, %p118
      %p121 = scmp.ne.s32.totalorder %s104, %s120
      %p122 = scmp.eq.s32.totalorder %s26, 0
      %p123 = por %p121, %p122
      %s124 = ssub.s32 %s27, %s39
      %s125 = ssub.s32 %s28, %s35
      %s126 = sor.u32 %s124, %s125
      %p127 = scmp.eq.s32.totalorder %s126, 0
      %s129 = sadd.s32 %s128, 1
      %s130 = scalar_select %p127, %s128, %s129
      %p133 = pneg %p127
      %p134 = scmp.eq.s32.totalorder %s20, 1
      %p135 = por %p133, %p134
      %p136 = scmp.ne.s32.totalorder %s128, %s131
      %p137 = scmp.eq.s32.totalorder %s20, 0
      %p138 = por %p136, %p137
      %p139 = scmp.ne.s32.totalorder %s128, %s131
      %p140 = scmp.eq.s32.totalorder %s25, 1
      %p141 = por %p139, %p140
      %p142 = scmp.ne.s32.totalorder %s131, %s132
      %p143 = scmp.eq.s32.totalorder %s25, 0
      %p144 = por %p142, %p143
      %p145 = scmp.ne.s32.totalorder %s131, %s132
      %p146 = scmp.eq.s32.totalorder %s26, 1
      %p147 = por %p145, %p146
      %p149 = scmp.ne.s32.totalorder %s132, %s148
      %p150 = scmp.eq.s32.totalorder %s26, 0
      %p151 = por %p149, %p150
      %s152 = ssub.s32 %s27, %s39
      %s153 = ssub.s32 %s28, %s35
      %s154 = sor.u32 %s152, %s153
      %p155 = scmp.eq.s32.totalorder %s154, 0
      %s157 = sadd.s32 %s156, 1
      %s158 = scalar_select %p155, %s156, %s157
      %p161 = pneg %p155
      %p162 = scmp.eq.s32.totalorder %s20, 1
      %p163 = por %p161, %p162
      %p164 = scmp.ne.s32.totalorder %s156, %s159
      %p165 = scmp.eq.s32.totalorder %s20, 0
      %p166 = por %p164, %p165
      %p167 = scmp.ne.s32.totalorder %s156, %s159
      %p168 = scmp.eq.s32.totalorder %s25, 1
      %p169 = por %p167, %p168
      %p170 = scmp.ne.s32.totalorder %s159, %s160
      %p171 = scmp.eq.s32.totalorder %s25, 0
      %p172 = por %p170, %p171
      %p173 = scmp.ne.s32.totalorder %s159, %s160
      %p174 = scmp.eq.s32.totalorder %s26, 1
      %p175 = por %p173, %p174
      %p177 = scmp.ne.s32.totalorder %s160, %s176
      %p178 = scmp.eq.s32.totalorder %s26, 0
      %p179 = por %p177, %p178
      %s180 = ssub.s32 %s27, %s39
      %s181 = ssub.s32 %s28, %s35
      %s182 = sor.u32 %s180, %s181
      %p183 = scmp.eq.s32.totalorder %s182, 0
      %s185 = sadd.s32 %s184, 1
      %s186 = scalar_select %p183, %s184, %s185
      %p189 = pneg %p183
      %p190 = scmp.eq.s32.totalorder %s20, 1
      %p191 = por %p189, %p190
      %p192 = scmp.ne.s32.totalorder %s184, %s187
      %p193 = scmp.eq.s32.totalorder %s20, 0
      %p194 = por %p192, %p193
      %p195 = scmp.ne.s32.totalorder %s184, %s187
      %p196 = scmp.eq.s32.totalorder %s25, 1
      %p197 = por %p195, %p196
      %p198 = scmp.ne.s32.totalorder %s187, %s188
      %p199 = scmp.eq.s32.totalorder %s25, 0
      %p200 = por %p198, %p199
      %p201 = scmp.ne.s32.totalorder %s187, %s188
      %p202 = scmp.eq.s32.totalorder %s26, 1
      %p203 = por %p201, %p202
      %p205 = scmp.ne.s32.totalorder %s188, %s204
      %p206 = scmp.eq.s32.totalorder %s26, 0
      %p207 = por %p205, %p206
      %p208 = scmp.le.s32.totalorder 1, %s20
      %p209 = scmp.lt.s32.totalorder %s20, 3
      %p210 = pnand %p208, %p209
      %p211 = pneg %p210
      // Predicated region
      $region9: #{tpu_custom_call.1} parent=5 // pred_check
        _
      $region10: #{tpu_custom_call.1} parent=5 // pred_check_branch
        %213 = sbr.rel (%p210) target = $region12
      $region11: #{tpu_custom_call.1} parent=5 // pred_region
        %s214 = ssub.s32 %s20, 1
      $region12: #{tpu_custom_call.1} parent=5 // pred_fallthru
        _
      %p215 = scmp.lt.s32.totalorder %s20, 2
      // Predicated region
      $region13: #{tpu_custom_call.1} parent=5 // pred_check
        %p216 = pneg %p215
      $region14: #{tpu_custom_call.1} parent=5 // pred_check_branch
        %218 = sbr.rel (%p216) target = $region16
      $region15: #{tpu_custom_call.1} parent=5 // pred_region
        // Predicated region
        $region17: #{tpu_custom_call.1} parent=15 // pred_check
          %p219 = pneg %p54
        $region18: #{tpu_custom_call.1} parent=15 // pred_check_branch
          %221 = sbr.rel (%p219) target = $region20
        $region19: #{tpu_custom_call.1} parent=15 // pred_region
          %s222 = sand.u32 %s44, 1
          %s223 = scalar_lea.sflag [#allocation3], %s222
          %s224 = sand.u32 %s44, 1
          %s225 = scalar_lea.vmem [#allocation2], %s224
          %s227 = ssub.s32 16, 16
          %228 = vsyncadd %s223, %s227
          %s229 = sadd.s32 %s28, %s27
          %s230 = smul.addr %s229, 16
          %s231 = scalar_lea.hbm %s0, %s230
          %s233 = sshll.u32 %s225, 4
          %s234 = int_to_ptr.vmem [resolvable:$true] %s233
          %236 = dma.hbm_to_vmem [thread:$0]  %s231, 16, %s234, %s223
        $region20: #{tpu_custom_call.1} parent=15 // pred_fallthru
          _
        // Predicated region
        $region21: #{tpu_custom_call.1} parent=15 // pred_check
          %p237 = pneg %p82
        $region22: #{tpu_custom_call.1} parent=15 // pred_check_branch
          %239 = sbr.rel (%p237) target = $region24
        $region23: #{tpu_custom_call.1} parent=15 // pred_region
          %s240 = sand.u32 %s20, 1
          %s241 = scalar_lea.sflag [#allocation5], %s240
          %s242 = sand.u32 %s72, 1
          %s243 = scalar_lea.vmem [#allocation4], %s242
          %s245 = ssub.s32 16, 16
          %246 = vsyncadd %s241, %s245
          %s247 = sadd.s32 %s28, %s27
          %s248 = smul.addr %s247, 16
          %s249 = scalar_lea.hbm %s1, %s248
          %s251 = sshll.u32 %s243, 4
          %s252 = int_to_ptr.vmem [resolvable:$true] %s251
          %254 = dma.hbm_to_vmem [thread:$0]  %s249, 16, %s252, %s241
        $region24: #{tpu_custom_call.1} parent=15 // pred_fallthru
          _
        // Predicated region
        $region25: #{tpu_custom_call.1} parent=15 // pred_check
          %p255 = pneg %p110
        $region26: #{tpu_custom_call.1} parent=15 // pred_check_branch
          %257 = sbr.rel (%p255) target = $region28
        $region27: #{tpu_custom_call.1} parent=15 // pred_region
          %p258 = scmp.lt.s32.totalorder %s27, 1
          %s259 = scalar_select %p258, %s27, 1
          %p260 = scmp.lt.s32.totalorder %s28, 0
          %s261 = scalar_select %p260, %s28, 0
          %s262 = sadd.s32 %s261, %s259
          %s263 = scalar_lea.vmem %s2, %s262
        $region28: #{tpu_custom_call.1} parent=15 // pred_fallthru
          _
        // Predicated region
        $region29: #{tpu_custom_call.1} parent=15 // pred_check
          %p264 = pneg %p138
        $region30: #{tpu_custom_call.1} parent=15 // pred_check_branch
          %266 = sbr.rel (%p264) target = $region32
        $region31: #{tpu_custom_call.1} parent=15 // pred_region
          %s267 = sand.u32 %s20, 1
          %s268 = scalar_lea.sflag [#allocation5], %s267
          %s269 = sand.u32 %s128, 1
          %s270 = smul.addr %s269, 8
          %s271 = scalar_lea.vmem [#allocation6], %s270
          %s273 = ssub.s32 128, 128
          %274 = vsyncadd %s268, %s273
          %s275 = sadd.s32 %s28, %s27
          %s276 = smul.addr %s275, 128
          %s277 = scalar_lea.hbm %s3, %s276
          %s279 = sshll.u32 %s271, 4
          %s280 = int_to_ptr.vmem [resolvable:$true] %s279
          %282 = dma.hbm_to_vmem [thread:$0]  %s277, 128, %s280, %s268
        $region32: #{tpu_custom_call.1} parent=15 // pred_fallthru
          _
        // Predicated region
        $region33: #{tpu_custom_call.1} parent=15 // pred_check
          %p283 = pneg %p166
        $region34: #{tpu_custom_call.1} parent=15 // pred_check_branch
          %285 = sbr.rel (%p283) target = $region36
        $region35: #{tpu_custom_call.1} parent=15 // pred_region
          %s286 = sand.u32 %s156, 1
          %s287 = scalar_lea.sflag [#allocation8], %s286
          %s288 = sand.u32 %s156, 1
          %s289 = smul.addr %s288, 8
          %s290 = scalar_lea.vmem [#allocation7], %s289
          %s292 = ssub.s32 128, 128
          %293 = vsyncadd %s287, %s292
          %s294 = sadd.s32 %s28, %s27
          %s295 = smul.addr %s294, 128
          %s296 = scalar_lea.hbm %s4, %s295
          %s298 = sshll.u32 %s290, 4
          %s299 = int_to_ptr.vmem [resolvable:$true] %s298
          %301 = dma.hbm_to_vmem [thread:$0]  %s296, 128, %s299, %s287
        $region36: #{tpu_custom_call.1} parent=15 // pred_fallthru
          _
      $region16: #{tpu_custom_call.1} parent=5 // pred_fallthru
        _
      %p302 = scmp.le.s32.totalorder 1, %s20
      %p303 = scmp.lt.s32.totalorder %s20, 3
      %p304 = pnand %p302, %p303
      %p305 = pneg %p304
      // Predicated region
      $region37: #{tpu_custom_call.1} parent=5 // pred_check
        _
      $region38: #{tpu_custom_call.1} parent=5 // pred_check_branch
        %307 = sbr.rel (%p304) target = $region40
      $region39: #{tpu_custom_call.1} parent=5 // pred_region
        %s308 = ssub.s32 %s20, 1
        %s309 = sand.u32 %s47, 1
        %s310 = scalar_lea.sflag [#allocation3], %s309
        %s311 = sand.u32 %s47, 1
        %s312 = scalar_lea.vmem [#allocation2], %s311
        // Predicated region
        $region41: #{tpu_custom_call.1} parent=39 // pred_check
          %p313 = pneg %p60
        $region42: #{tpu_custom_call.1} parent=39 // pred_check_branch
          %315 = sbr.rel (%p313) target = $region44
        $region43: #{tpu_custom_call.1} parent=39 // pred_region
          %316 = dma.done %s310, 16
        $region44: #{tpu_custom_call.1} parent=39 // pred_fallthru
          _
        %s317 = sand.u32 %s25, 1
        %s318 = scalar_lea.sflag [#allocation5], %s317
        %s319 = sand.u32 %s75, 1
        %s320 = scalar_lea.vmem [#allocation4], %s319
        // Predicated region
        $region45: #{tpu_custom_call.1} parent=39 // pred_check
          %p321 = pneg %p88
        $region46: #{tpu_custom_call.1} parent=39 // pred_check_branch
          %323 = sbr.rel (%p321) target = $region48
        $region47: #{tpu_custom_call.1} parent=39 // pred_region
          %324 = dma.done %s318, 16
        $region48: #{tpu_custom_call.1} parent=39 // pred_fallthru
          _
        %s325 = sand.u32 %s25, 1
        %s326 = scalar_lea.sflag [#allocation5], %s325
        %s327 = sand.u32 %s131, 1
        %s328 = smul.addr %s327, 8
        %s329 = scalar_lea.vmem [#allocation6], %s328
        // Predicated region
        $region49: #{tpu_custom_call.1} parent=39 // pred_check
          %p330 = pneg %p144
        $region50: #{tpu_custom_call.1} parent=39 // pred_check_branch
          %332 = sbr.rel (%p330) target = $region52
        $region51: #{tpu_custom_call.1} parent=39 // pred_region
          %333 = dma.done %s326, 128
        $region52: #{tpu_custom_call.1} parent=39 // pred_fallthru
          _
        %s334 = sand.u32 %s159, 1
        %s335 = scalar_lea.sflag [#allocation8], %s334
        %s336 = sand.u32 %s159, 1
        %s337 = smul.addr %s336, 8
        %s338 = scalar_lea.vmem [#allocation7], %s337
        // Predicated region
        $region53: #{tpu_custom_call.1} parent=39 // pred_check
          %p339 = pneg %p172
        $region54: #{tpu_custom_call.1} parent=39 // pred_check_branch
          %341 = sbr.rel (%p339) target = $region56
        $region55: #{tpu_custom_call.1} parent=39 // pred_region
          %342 = dma.done %s335, 128
        $region56: #{tpu_custom_call.1} parent=39 // pred_fallthru
          _
        %s343 = sand.u32 %s47, 1
        %s344 = scalar_lea.sflag [#allocation3], %s343
        %s345 = sand.u32 %s47, 1
        %s346 = scalar_lea.vmem [#allocation2], %s345
        %p347 = pneg %p60
        %p348 = pneg %p57
        %s349 = sand.u32 %s25, 1
        %s350 = scalar_lea.sflag [#allocation5], %s349
        %s351 = sand.u32 %s75, 1
        %s352 = scalar_lea.vmem [#allocation4], %s351
        %p353 = pneg %p88
        %p354 = pneg %p85
        %p355 = scmp.lt.s32.totalorder %s29, 1
        %s356 = scalar_select %p355, %s29, 1
        %p357 = scmp.lt.s32.totalorder %s30, 0
        %s358 = scalar_select %p357, %s30, 0
        %s359 = sadd.s32 %s358, %s356
        %s360 = scalar_lea.vmem %s2, %s359
        %p361 = pneg %p116
        %p362 = pneg %p113
        %s363 = sand.u32 %s25, 1
        %s364 = scalar_lea.sflag [#allocation5], %s363
        %s365 = sand.u32 %s131, 1
        %s366 = smul.addr %s365, 8
        %s367 = scalar_lea.vmem [#allocation6], %s366
        %p368 = pneg %p144
        %p369 = pneg %p141
        %s370 = sand.u32 %s159, 1
        %s371 = scalar_lea.sflag [#allocation8], %s370
        %s372 = sand.u32 %s159, 1
        %s373 = smul.addr %s372, 8
        %s374 = scalar_lea.vmem [#allocation7], %s373
        %p375 = pneg %p172
        %p376 = pneg %p169
        %p377 = pneg %p200
        %p378 = pneg %p197
        %p379 = scmp.lt.s32.totalorder %s29, 1
        %s380 = scalar_select %p379, %s29, 1
        %p381 = scmp.lt.s32.totalorder %s30, 0
        %s382 = scalar_select %p381, %s30, 0
        %s383 = smul.addr %s380, 2
        %s384 = sadd.s32 %s382, %s383
        %s385 = smul.addr %s384, 8
        %s386 = scalar_lea.vmem %s5, %s385
        %p387 = scmp.lt.s32.totalorder %s29, 1
        %s388 = scalar_select %p387, %s29, 1
        %p389 = scmp.lt.s32.totalorder %s30, 0
        %s390 = scalar_select %p389, %s30, 0
        %s391 = sadd.s32 %s390, %s388
        %s392 = scalar_lea.vmem %s2, %s391
        %p393 = scmp.lt.s32.totalorder %s29, 1
        %s394 = scalar_select %p393, %s29, 1
        %p395 = scmp.lt.s32.totalorder %s30, 0
        %s396 = scalar_select %p395, %s30, 0
        %s397 = smul.addr %s394, 2
        %s398 = sadd.s32 %s396, %s397
        %s399 = smul.addr %s398, 8
        %s400 = scalar_lea.vmem %s5, %s399
        %v401 = vld [vmem:[%s312] sm:$0x1]
        %v402 = vld [vmem:[%s320] sm:$0x1]
        %v403 = vld [vmem:[%s392] sm:$0x1]
        %v404 = vlaneseq
        %v405 = vshrl.u32 %v404, 7
        %v406 = vadd.s32 %v405, 8
        %v407 = vcvt.s32.f32 %v405
        %v408 = vcvt.s32.f32 %v406
        %v409 = vadd.f32 %v407, 1.0
        %v410 = vadd.f32 %v408, 1.0
        %v411 = vmul.f32 %v407, %v409
        %v412 = vmul.f32 %v408, %v410
        %v413 = vmul.f32 %v411, 0.5
        %v414 = vmul.f32 %v412, 0.5
        %v415 = vmul.f32 %v413, 0.0625
        %v416 = vmul.f32 %v414, 0.0625
        %v417 = vsub.f32 %v409, %v415
        %v418 = vsub.f32 %v410, %v416
        %v419 = vmul.f32 %v417, 6.25e-05
        %v420 = vmul.f32 %v418, 6.25e-05
        %v421 = vmul.f32 %v415, 6.25e-05
        %v422 = vmul.f32 %v416, 6.25e-05
        %v423 = vmul.f32 %v407, 0.0625
        %v424 = vmul.f32 %v408, 0.0625
        %v426 = vlaneseq
        %v427 = vshrl.u32 %v426, 7
        %v428 = vsub.s32 0, %v427
        %v429 = vrot.slane %v402, %v428
        %v431 = vmul.f32 %v419, %v429
        %v432 = vmul.f32 %v420, %v429
        %v434 = vlaneseq
        %v435 = vshrl.u32 %v434, 7
        %v436 = vsub.s32 0, %v435
        %v437 = vrot.slane %v401, %v436
        %v439 = vadd.f32 %v437, %v431
        %v440 = vadd.f32 %v437, %v432
        %v442 = vlaneseq
        %v443 = vshrl.u32 %v442, 7
        %v444 = vsub.s32 0, %v443
        %v445 = vrot.slane %v403, %v444
        %v447 = vmul.f32 %v421, %v445
        %v448 = vmul.f32 %v422, %v445
        %v449 = vadd.f32 %v439, %v447
        %v450 = vadd.f32 %v440, %v448
        %v451 = vfloor.f32 %v449
        %v452 = vfloor.f32 %v450
        %v453 = vsub.f32 %v449, %v451
        %v454 = vsub.f32 %v450, %v452
        %v455 = vmul.f32 %v453, 6.2831855
        %v456 = vmul.f32 %v454, 6.2831855
        %v457 = vand.u32 2147483647, %v455
        %vm458 = vcmp.le.f32.partialorder %v457, 0.7853982
        %vm459 = vcmp.lt.s32.totalorder %v455, 0
        %v460 = vand.u32 %v455, 2139095040
        %v461 = vshrl.u32 %v460, 23
        %v462 = vsub.s32 %v461, 127
        %v463 = vand.u32 2147483647, %v455
        %v464 = vand.u32 %v463, 8388607
        %v465 = vor.u32 %v464, 8388608
        %v466 = vsub.s32 0, %v465
        %v467 = vadd.s32 %v462, 1
        %vm468 = vcmp.gt.s32.totalorder %v467, 0
        %v469 = vsel %vm468, %v467, 0
        %v470 = vshrl.u32 %v469, 5
        %v471 = vand.u32 %v469, 31
        %v472 = vsub.s32 32, %v471
        %v473 = vshrl.u32 683565275, %v472
        %v474 = vshll.u32 683565275, %v471
        %v475 = vshrl.u32 2475754826, %v472
        %v476 = vor.u32 %v474, %v475
        %v477 = vshll.u32 2475754826, %v471
        %v478 = vshrl.u32 2131351028, %v472
        %v479 = vor.u32 %v477, %v478
        %v480 = vshll.u32 2131351028, %v471
        %v481 = vshrl.u32 2102212464, %v472
        %v482 = vor.u32 %v480, %v481
        %v483 = vshll.u32 2102212464, %v471
        %v484 = vshrl.u32 920167782, %v472
        %v485 = vor.u32 %v483, %v484
        %v486 = vshll.u32 920167782, %v471
        %v487 = vshrl.u32 1326507024, %v472
        %v488 = vor.u32 %v486, %v487
        %vm489 = vcmp.lt.s32.totalorder %v470, 1
        %vm490 = vcmp.lt.s32.totalorder %v470, 2
        %vm491 = vcmp.lt.s32.totalorder %v470, 3
        %vm492 = vcmp.lt.s32.totalorder %v470, 4
        %v493 = vsel %vm489, %v473, %v476
        %v494 = vsel %vm492, %v482, 2102212464
        %v495 = vsel %vm491, %v479, %v494
        %v496 = vsel %vm490, %v493, %v495
        %v497 = vsel %vm489, %v476, %v479
        %v498 = vsel %vm492, %v485, 920167782
        %v499 = vsel %vm491, %v482, %v498
        %v500 = vsel %vm490, %v497, %v499
        %v501 = vsel %vm489, %v479, %v482
        %v502 = vsel %vm492, %v488, 1326507024
        %v503 = vsel %vm491, %v485, %v502
        %v504 = vsel %vm490, %v501, %v503
        %v505 = vshll.u32 %v465, 8
        %v506 = vmul.u32.u64.compose %v505, %v504
        %v507 = vextract.low.u32 %v506
        %v508 = vextract.high.u32 %v506
        %v509 = vmul.u32.u64.compose %v505, %v500
        %v510 = vextract.low.u32 %v509
        %v511 = vextract.high.u32 %v509
        %v512 = vmul.u32 %v505, %v496
        %v513 = vadd.s32 %v508, %v510
        %vm514 = vc.u32 %v508, %v510
        %v515 = vadd.s32 %v511, 1
        %v516 = vsel %vm514, %v515, %v511
        %v517 = vadd.s32 %v512, %v516
        %v518 = vadd.s32 %v517, 536870912
        %v519 = vshrl.u32 %v518, 30
        %v520 = vshll.u32 %v519, 30
        %v521 = vsub.s32 %v517, %v520
        %vm522 = vcmp.lt.s32.totalorder %v521, 0
        %v523 = vsub.s32 0, %v521
        %v524 = vsel %vm522, %v523, %v521
        %v525 = vclz %v524
        %v526 = vsub.s32 %v525, 2
        %vm527 = vcmp.gt.s32.totalorder 0, %v526
        %v528 = vsel %vm527, 0, %v526
        %v529 = vsub.s32 32, %v528
        %v530 = vshll.u32 %v521, %v528
        %v531 = vshrl.u32 %v513, %v529
        %v532 = vor.u32 %v530, %v531
        %v533 = vsub.s32 4294967266, %v528
        %v534 = vadd.s32 %v533, 127
        %v535 = vshll.u32 %v534, 23
        %v536 = vor.u32 4788187, %v535
        %v537 = vand.u32 2147483647, %v536
        %v539 = vcvt.s32.f32 %v532
        %v540 = vmul.f32 %v539, %v537
        %v541 = vxor.u32 %v540, 2147483648
        %v542 = vsel %vm459, %v541, %v540
        %v543 = vsub.s32 4, %v519
        %v544 = vsel %vm459, %v543, %v519
        %v545 = vsel %vm458, %v455, %v542
        %v546 = vsel %vm458, 0, %v544
        %v547 = vcosq.f32.pop %v545
        %v548 = vsinq.f32.pop %v545
        %vm549 = vweird.f32 %v455
        %v550 = vadd.s32 %v546, 3
        %v551 = vand.u32 %v550, 3
        %vm552 = vcmp.lt.s32.totalorder %v551, 2
        %vm553 = vcmp.eq.s32.totalorder %v551, 0
        %v554 = vxor.u32 %v548, 2147483648
        %v555 = vsel %vm553, %v547, %v554
        %vm556 = vcmp.eq.s32.totalorder %v551, 2
        %v557 = vxor.u32 %v547, 2147483648
        %v558 = vsel %vm556, %v557, %v548
        %v559 = vsel %vm552, %v555, %v558
        %v560 = vsel %vm549, nan, %v559
        %v561 = vand.u32 2147483647, %v456
        %vm562 = vcmp.le.f32.partialorder %v561, 0.7853982
        %vm563 = vcmp.lt.s32.totalorder %v456, 0
        %v564 = vand.u32 %v456, 2139095040
        %v565 = vshrl.u32 %v564, 23
        %v566 = vsub.s32 %v565, 127
        %v567 = vand.u32 2147483647, %v456
        %v568 = vand.u32 %v567, 8388607
        %v569 = vor.u32 %v568, 8388608
        %v570 = vsub.s32 0, %v569
        %v571 = vadd.s32 %v566, 1
        %vm572 = vcmp.gt.s32.totalorder %v571, 0
        %v573 = vsel %vm572, %v571, 0
        %v574 = vshrl.u32 %v573, 5
        %v575 = vand.u32 %v573, 31
        %v576 = vsub.s32 32, %v575
        %v577 = vshrl.u32 683565275, %v576
        %v578 = vshll.u32 683565275, %v575
        %v579 = vshrl.u32 2475754826, %v576
        %v580 = vor.u32 %v578, %v579
        %v581 = vshll.u32 2475754826, %v575
        %v582 = vshrl.u32 2131351028, %v576
        %v583 = vor.u32 %v581, %v582
        %v584 = vshll.u32 2131351028, %v575
        %v585 = vshrl.u32 2102212464, %v576
        %v586 = vor.u32 %v584, %v585
        %v587 = vshll.u32 2102212464, %v575
        %v588 = vshrl.u32 920167782, %v576
        %v589 = vor.u32 %v587, %v588
        %v590 = vshll.u32 920167782, %v575
        %v591 = vshrl.u32 1326507024, %v576
        %v592 = vor.u32 %v590, %v591
        %vm593 = vcmp.lt.s32.totalorder %v574, 1
        %vm594 = vcmp.lt.s32.totalorder %v574, 2
        %vm595 = vcmp.lt.s32.totalorder %v574, 3
        %vm596 = vcmp.lt.s32.totalorder %v574, 4
        %v597 = vsel %vm593, %v577, %v580
        %v598 = vsel %vm596, %v586, 2102212464
        %v599 = vsel %vm595, %v583, %v598
        %v600 = vsel %vm594, %v597, %v599
        %v601 = vsel %vm593, %v580, %v583
        %v602 = vsel %vm596, %v589, 920167782
        %v603 = vsel %vm595, %v586, %v602
        %v604 = vsel %vm594, %v601, %v603
        %v605 = vsel %vm593, %v583, %v586
        %v606 = vsel %vm596, %v592, 1326507024
        %v607 = vsel %vm595, %v589, %v606
        %v608 = vsel %vm594, %v605, %v607
        %v609 = vshll.u32 %v569, 8
        %v610 = vmul.u32.u64.compose %v609, %v608
        %v611 = vextract.low.u32 %v610
        %v612 = vextract.high.u32 %v610
        %v613 = vmul.u32.u64.compose %v609, %v604
        %v614 = vextract.low.u32 %v613
        %v615 = vextract.high.u32 %v613
        %v616 = vmul.u32 %v609, %v600
        %v617 = vadd.s32 %v612, %v614
        %vm618 = vc.u32 %v612, %v614
        %v619 = vadd.s32 %v615, 1
        %v620 = vsel %vm618, %v619, %v615
        %v621 = vadd.s32 %v616, %v620
        %v622 = vadd.s32 %v621, 536870912
        %v623 = vshrl.u32 %v622, 30
        %v624 = vshll.u32 %v623, 30
        %v625 = vsub.s32 %v621, %v624
        %vm626 = vcmp.lt.s32.totalorder %v625, 0
        %v627 = vsub.s32 0, %v625
        %v628 = vsel %vm626, %v627, %v625
        %v629 = vclz %v628
        %v630 = vsub.s32 %v629, 2
        %vm631 = vcmp.gt.s32.totalorder 0, %v630
        %v632 = vsel %vm631, 0, %v630
        %v633 = vsub.s32 32, %v632
        %v634 = vshll.u32 %v625, %v632
        %v635 = vshrl.u32 %v617, %v633
        %v636 = vor.u32 %v634, %v635
        %v637 = vsub.s32 4294967266, %v632
        %v638 = vadd.s32 %v637, 127
        %v639 = vshll.u32 %v638, 23
        %v640 = vor.u32 4788187, %v639
        %v641 = vand.u32 2147483647, %v640
        %v643 = vcvt.s32.f32 %v636
        %v644 = vmul.f32 %v643, %v641
        %v645 = vxor.u32 %v644, 2147483648
        %v646 = vsel %vm563, %v645, %v644
        %v647 = vsub.s32 4, %v623
        %v648 = vsel %vm563, %v647, %v623
        %v649 = vsel %vm562, %v456, %v646
        %v650 = vsel %vm562, 0, %v648
        %v651 = vcosq.f32.pop %v649
        %v652 = vsinq.f32.pop %v649
        %vm653 = vweird.f32 %v456
        %v654 = vadd.s32 %v650, 3
        %v655 = vand.u32 %v654, 3
        %vm656 = vcmp.lt.s32.totalorder %v655, 2
        %vm657 = vcmp.eq.s32.totalorder %v655, 0
        %v658 = vxor.u32 %v652, 2147483648
        %v659 = vsel %vm657, %v651, %v658
        %vm660 = vcmp.eq.s32.totalorder %v655, 2
        %v661 = vxor.u32 %v651, 2147483648
        %v662 = vsel %vm660, %v661, %v652
        %v663 = vsel %vm656, %v659, %v662
        %v664 = vsel %vm653, nan, %v663
        %v665 = vand.u32 2147483647, %v455
        %vm666 = vcmp.le.f32.partialorder %v665, 0.7853982
        %vm667 = vcmp.lt.s32.totalorder %v455, 0
        %v668 = vand.u32 %v455, 2139095040
        %v669 = vshrl.u32 %v668, 23
        %v670 = vsub.s32 %v669, 127
        %v671 = vand.u32 2147483647, %v455
        %v672 = vand.u32 %v671, 8388607
        %v673 = vor.u32 %v672, 8388608
        %v674 = vsub.s32 0, %v673
        %v675 = vadd.s32 %v670, 1
        %vm676 = vcmp.gt.s32.totalorder %v675, 0
        %v677 = vsel %vm676, %v675, 0
        %v678 = vshrl.u32 %v677, 5
        %v679 = vand.u32 %v677, 31
        %v680 = vsub.s32 32, %v679
        %v681 = vshrl.u32 683565275, %v680
        %v682 = vshll.u32 683565275, %v679
        %v683 = vshrl.u32 2475754826, %v680
        %v684 = vor.u32 %v682, %v683
        %v685 = vshll.u32 2475754826, %v679
        %v686 = vshrl.u32 2131351028, %v680
        %v687 = vor.u32 %v685, %v686
        %v688 = vshll.u32 2131351028, %v679
        %v689 = vshrl.u32 2102212464, %v680
        %v690 = vor.u32 %v688, %v689
        %v691 = vshll.u32 2102212464, %v679
        %v692 = vshrl.u32 920167782, %v680
        %v693 = vor.u32 %v691, %v692
        %v694 = vshll.u32 920167782, %v679
        %v695 = vshrl.u32 1326507024, %v680
        %v696 = vor.u32 %v694, %v695
        %vm697 = vcmp.lt.s32.totalorder %v678, 1
        %vm698 = vcmp.lt.s32.totalorder %v678, 2
        %vm699 = vcmp.lt.s32.totalorder %v678, 3
        %vm700 = vcmp.lt.s32.totalorder %v678, 4
        %v701 = vsel %vm697, %v681, %v684
        %v702 = vsel %vm700, %v690, 2102212464
        %v703 = vsel %vm699, %v687, %v702
        %v704 = vsel %vm698, %v701, %v703
        %v705 = vsel %vm697, %v684, %v687
        %v706 = vsel %vm700, %v693, 920167782
        %v707 = vsel %vm699, %v690, %v706
        %v708 = vsel %vm698, %v705, %v707
        %v709 = vsel %vm697, %v687, %v690
        %v710 = vsel %vm700, %v696, 1326507024
        %v711 = vsel %vm699, %v693, %v710
        %v712 = vsel %vm698, %v709, %v711
        %v713 = vshll.u32 %v673, 8
        %v714 = vmul.u32.u64.compose %v713, %v712
        %v715 = vextract.low.u32 %v714
        %v716 = vextract.high.u32 %v714
        %v717 = vmul.u32.u64.compose %v713, %v708
        %v718 = vextract.low.u32 %v717
        %v719 = vextract.high.u32 %v717
        %v720 = vmul.u32 %v713, %v704
        %v721 = vadd.s32 %v716, %v718
        %vm722 = vc.u32 %v716, %v718
        %v723 = vadd.s32 %v719, 1
        %v724 = vsel %vm722, %v723, %v719
        %v725 = vadd.s32 %v720, %v724
        %v726 = vadd.s32 %v725, 536870912
        %v727 = vshrl.u32 %v726, 30
        %v728 = vshll.u32 %v727, 30
        %v729 = vsub.s32 %v725, %v728
        %vm730 = vcmp.lt.s32.totalorder %v729, 0
        %v731 = vsub.s32 0, %v729
        %v732 = vsel %vm730, %v731, %v729
        %v733 = vclz %v732
        %v734 = vsub.s32 %v733, 2
        %vm735 = vcmp.gt.s32.totalorder 0, %v734
        %v736 = vsel %vm735, 0, %v734
        %v737 = vsub.s32 32, %v736
        %v738 = vshll.u32 %v729, %v736
        %v739 = vshrl.u32 %v721, %v737
        %v740 = vor.u32 %v738, %v739
        %v741 = vsub.s32 4294967266, %v736
        %v742 = vadd.s32 %v741, 127
        %v743 = vshll.u32 %v742, 23
        %v744 = vor.u32 4788187, %v743
        %v745 = vand.u32 2147483647, %v744
        %v747 = vcvt.s32.f32 %v740
        %v748 = vmul.f32 %v747, %v745
        %v749 = vxor.u32 %v748, 2147483648
        %v750 = vsel %vm667, %v749, %v748
        %v751 = vsub.s32 4, %v727
        %v752 = vsel %vm667, %v751, %v727
        %v753 = vsel %vm666, %v455, %v750
        %v754 = vsel %vm666, 0, %v752
        %v755 = vcosq.f32.pop %v753
        %v756 = vsinq.f32.pop %v753
        %vm757 = vweird.f32 %v455
        %v758 = vand.u32 %v754, 3
        %vm759 = vcmp.lt.s32.totalorder %v758, 2
        %vm760 = vcmp.eq.s32.totalorder %v758, 0
        %v761 = vxor.u32 %v756, 2147483648
        %v762 = vsel %vm760, %v755, %v761
        %vm763 = vcmp.eq.s32.totalorder %v758, 2
        %v764 = vxor.u32 %v755, 2147483648
        %v765 = vsel %vm763, %v764, %v756
        %v766 = vsel %vm759, %v762, %v765
        %v767 = vsel %vm757, nan, %v766
        %v768 = vand.u32 2147483647, %v456
        %vm769 = vcmp.le.f32.partialorder %v768, 0.7853982
        %vm770 = vcmp.lt.s32.totalorder %v456, 0
        %v771 = vand.u32 %v456, 2139095040
        %v772 = vshrl.u32 %v771, 23
        %v773 = vsub.s32 %v772, 127
        %v774 = vand.u32 2147483647, %v456
        %v775 = vand.u32 %v774, 8388607
        %v776 = vor.u32 %v775, 8388608
        %v777 = vsub.s32 0, %v776
        %v778 = vadd.s32 %v773, 1
        %vm779 = vcmp.gt.s32.totalorder %v778, 0
        %v780 = vsel %vm779, %v778, 0
        %v781 = vshrl.u32 %v780, 5
        %v782 = vand.u32 %v780, 31
        %v783 = vsub.s32 32, %v782
        %v784 = vshrl.u32 683565275, %v783
        %v785 = vshll.u32 683565275, %v782
        %v786 = vshrl.u32 2475754826, %v783
        %v787 = vor.u32 %v785, %v786
        %v788 = vshll.u32 2475754826, %v782
        %v789 = vshrl.u32 2131351028, %v783
        %v790 = vor.u32 %v788, %v789
        %v791 = vshll.u32 2131351028, %v782
        %v792 = vshrl.u32 2102212464, %v783
        %v793 = vor.u32 %v791, %v792
        %v794 = vshll.u32 2102212464, %v782
        %v795 = vshrl.u32 920167782, %v783
        %v796 = vor.u32 %v794, %v795
        %v797 = vshll.u32 920167782, %v782
        %v798 = vshrl.u32 1326507024, %v783
        %v799 = vor.u32 %v797, %v798
        %vm800 = vcmp.lt.s32.totalorder %v781, 1
        %vm801 = vcmp.lt.s32.totalorder %v781, 2
        %vm802 = vcmp.lt.s32.totalorder %v781, 3
        %vm803 = vcmp.lt.s32.totalorder %v781, 4
        %v804 = vsel %vm800, %v784, %v787
        %v805 = vsel %vm803, %v793, 2102212464
        %v806 = vsel %vm802, %v790, %v805
        %v807 = vsel %vm801, %v804, %v806
        %v808 = vsel %vm800, %v787, %v790
        %v809 = vsel %vm803, %v796, 920167782
        %v810 = vsel %vm802, %v793, %v809
        %v811 = vsel %vm801, %v808, %v810
        %v812 = vsel %vm800, %v790, %v793
        %v813 = vsel %vm803, %v799, 1326507024
        %v814 = vsel %vm802, %v796, %v813
        %v815 = vsel %vm801, %v812, %v814
        %v816 = vshll.u32 %v776, 8
        %v817 = vmul.u32.u64.compose %v816, %v815
        %v818 = vextract.low.u32 %v817
        %v819 = vextract.high.u32 %v817
        %v820 = vmul.u32.u64.compose %v816, %v811
        %v821 = vextract.low.u32 %v820
        %v822 = vextract.high.u32 %v820
        %v823 = vmul.u32 %v816, %v807
        %v824 = vadd.s32 %v819, %v821
        %vm825 = vc.u32 %v819, %v821
        %v826 = vadd.s32 %v822, 1
        %v827 = vsel %vm825, %v826, %v822
        %v828 = vadd.s32 %v823, %v827
        %v829 = vadd.s32 %v828, 536870912
        %v830 = vshrl.u32 %v829, 30
        %v831 = vshll.u32 %v830, 30
        %v832 = vsub.s32 %v828, %v831
        %vm833 = vcmp.lt.s32.totalorder %v832, 0
        %v834 = vsub.s32 0, %v832
        %v835 = vsel %vm833, %v834, %v832
        %v836 = vclz %v835
        %v837 = vsub.s32 %v836, 2
        %vm838 = vcmp.gt.s32.totalorder 0, %v837
        %v839 = vsel %vm838, 0, %v837
        %v840 = vsub.s32 32, %v839
        %v841 = vshll.u32 %v832, %v839
        %v842 = vshrl.u32 %v824, %v840
        %v843 = vor.u32 %v841, %v842
        %v844 = vsub.s32 4294967266, %v839
        %v845 = vadd.s32 %v844, 127
        %v846 = vshll.u32 %v845, 23
        %v847 = vor.u32 4788187, %v846
        %v848 = vand.u32 2147483647, %v847
        %v850 = vcvt.s32.f32 %v843
        %v851 = vmul.f32 %v850, %v848
        %v852 = vxor.u32 %v851, 2147483648
        %v853 = vsel %vm770, %v852, %v851
        %v854 = vsub.s32 4, %v830
        %v855 = vsel %vm770, %v854, %v830
        %v856 = vsel %vm769, %v456, %v853
        %v857 = vsel %vm769, 0, %v855
        %v858 = vcosq.f32.pop %v856
        %v859 = vsinq.f32.pop %v856
        %vm860 = vweird.f32 %v456
        %v861 = vand.u32 %v857, 3
        %vm862 = vcmp.lt.s32.totalorder %v861, 2
        %vm863 = vcmp.eq.s32.totalorder %v861, 0
        %v864 = vxor.u32 %v859, 2147483648
        %v865 = vsel %vm863, %v858, %v864
        %vm866 = vcmp.eq.s32.totalorder %v861, 2
        %v867 = vxor.u32 %v858, 2147483648
        %v868 = vsel %vm866, %v867, %v859
        %v869 = vsel %vm862, %v865, %v868
        %v870 = vsel %vm860, nan, %v869
        %v871 = vadd.f32 %v767, %v767
        %v872 = vadd.f32 %v870, %v870
        %v873 = vld [vmem:[%s329] sm:$0x1]
        %v874 = vld [vmem:[%s338] sm:$0x1]
        %v875 = vlaneseq
        %v876 = vshrl.u32 %v875, 7
        %v877 = vsub.s32 0, %v876
        %v878 = vrot.slane %v874, %v877
        %v879 = vmul.f32 %v423, %v878
        %v880 = vmul.f32 %v424, %v878
        %v881 = vlaneseq
        %v882 = vshrl.u32 %v881, 7
        %v883 = vsub.s32 0, %v882
        %v884 = vrot.slane %v873, %v883
        %v885 = vadd.f32 %v884, %v879
        %v886 = vadd.f32 %v884, %v880
        %v887 = vmul.f32 %v560, %v885
        %v888 = vmul.f32 %v664, %v886
        %v889 = vmul.f32 %v871, %v560
        %v890 = vmul.f32 %v872, %v664
        %v891 = vld [vmem:[%s329 + $0x1] sm:$0x1]
        %v892 = vld [vmem:[%s338 + $0x1] sm:$0x1]
        %v893 = vlaneseq
        %v894 = vshrl.u32 %v893, 7
        %v895 = vsub.s32 0, %v894
        %v896 = vrot.slane %v892, %v895
        %v897 = vmul.f32 %v423, %v896
        %v898 = vmul.f32 %v424, %v896
        %v899 = vlaneseq
        %v900 = vshrl.u32 %v899, 7
        %v901 = vsub.s32 0, %v900
        %v902 = vrot.slane %v891, %v901
        %v903 = vadd.f32 %v902, %v897
        %v904 = vadd.f32 %v902, %v898
        %v905 = vmul.f32 %v889, %v903
        %v906 = vmul.f32 %v890, %v904
        %v907 = vadd.f32 %v887, %v905
        %v908 = vadd.f32 %v888, %v906
        %v909 = vmul.f32 %v871, %v889
        %v910 = vmul.f32 %v872, %v890
        %v911 = vsub.f32 %v909, %v560
        %v912 = vsub.f32 %v910, %v664
        %v913 = vld [vmem:[%s329 + $0x2] sm:$0x1]
        %v914 = vld [vmem:[%s338 + $0x2] sm:$0x1]
        %v915 = vlaneseq
        %v916 = vshrl.u32 %v915, 7
        %v917 = vsub.s32 0, %v916
        %v918 = vrot.slane %v914, %v917
        %v919 = vmul.f32 %v423, %v918
        %v920 = vmul.f32 %v424, %v918
        %v921 = vlaneseq
        %v922 = vshrl.u32 %v921, 7
        %v923 = vsub.s32 0, %v922
        %v924 = vrot.slane %v913, %v923
        %v925 = vadd.f32 %v924, %v919
        %v926 = vadd.f32 %v924, %v920
        %v927 = vmul.f32 %v911, %v925
        %v928 = vmul.f32 %v912, %v926
        %v929 = vadd.f32 %v907, %v927
        %v930 = vadd.f32 %v908, %v928
        %v931 = vmul.f32 %v871, %v911
        %v932 = vmul.f32 %v872, %v912
        %v933 = vsub.f32 %v931, %v889
        %v934 = vsub.f32 %v932, %v890
        %v935 = vld [vmem:[%s329 + $0x3] sm:$0x1]
        %v936 = vld [vmem:[%s338 + $0x3] sm:$0x1]
        %v937 = vlaneseq
        %v938 = vshrl.u32 %v937, 7
        %v939 = vsub.s32 0, %v938
        %v940 = vrot.slane %v936, %v939
        %v941 = vmul.f32 %v423, %v940
        %v942 = vmul.f32 %v424, %v940
        %v943 = vlaneseq
        %v944 = vshrl.u32 %v943, 7
        %v945 = vsub.s32 0, %v944
        %v946 = vrot.slane %v935, %v945
        %v947 = vadd.f32 %v946, %v941
        %v948 = vadd.f32 %v946, %v942
        %v949 = vmul.f32 %v933, %v947
        %v950 = vmul.f32 %v934, %v948
        %v951 = vadd.f32 %v929, %v949
        %v952 = vadd.f32 %v930, %v950
        %v953 = vmul.f32 %v871, %v933
        %v954 = vmul.f32 %v872, %v934
        %v955 = vsub.f32 %v953, %v911
        %v956 = vsub.f32 %v954, %v912
        %v957 = vld [vmem:[%s329 + $0x4] sm:$0x1]
        %v958 = vld [vmem:[%s338 + $0x4] sm:$0x1]
        %v959 = vlaneseq
        %v960 = vshrl.u32 %v959, 7
        %v961 = vsub.s32 0, %v960
        %v962 = vrot.slane %v958, %v961
        %v963 = vmul.f32 %v423, %v962
        %v964 = vmul.f32 %v424, %v962
        %v965 = vlaneseq
        %v966 = vshrl.u32 %v965, 7
        %v967 = vsub.s32 0, %v966
        %v968 = vrot.slane %v957, %v967
        %v969 = vadd.f32 %v968, %v963
        %v970 = vadd.f32 %v968, %v964
        %v971 = vmul.f32 %v955, %v969
        %v972 = vmul.f32 %v956, %v970
        %v973 = vadd.f32 %v951, %v971
        %v974 = vadd.f32 %v952, %v972
        %v975 = vmul.f32 %v871, %v955
        %v976 = vmul.f32 %v872, %v956
        %v977 = vsub.f32 %v975, %v933
        %v978 = vsub.f32 %v976, %v934
        %v979 = vld [vmem:[%s329 + $0x5] sm:$0x1]
        %v980 = vld [vmem:[%s338 + $0x5] sm:$0x1]
        %v981 = vlaneseq
        %v982 = vshrl.u32 %v981, 7
        %v983 = vsub.s32 0, %v982
        %v984 = vrot.slane %v980, %v983
        %v985 = vmul.f32 %v423, %v984
        %v986 = vmul.f32 %v424, %v984
        %v987 = vlaneseq
        %v988 = vshrl.u32 %v987, 7
        %v989 = vsub.s32 0, %v988
        %v990 = vrot.slane %v979, %v989
        %v991 = vadd.f32 %v990, %v985
        %v992 = vadd.f32 %v990, %v986
        %v993 = vmul.f32 %v977, %v991
        %v994 = vmul.f32 %v978, %v992
        %v995 = vadd.f32 %v973, %v993
        %v996 = vadd.f32 %v974, %v994
        %v997 = vmul.f32 %v871, %v977
        %v998 = vmul.f32 %v872, %v978
        %v999 = vsub.f32 %v997, %v955
        %v1000 = vsub.f32 %v998, %v956
        %v1001 = vld [vmem:[%s329 + $0x6] sm:$0x1]
        %v1002 = vld [vmem:[%s338 + $0x6] sm:$0x1]
        %v1003 = vlaneseq
        %v1004 = vshrl.u32 %v1003, 7
        %v1005 = vsub.s32 0, %v1004
        %v1006 = vrot.slane %v1002, %v1005
        %v1007 = vmul.f32 %v423, %v1006
        %v1008 = vmul.f32 %v424, %v1006
        %v1009 = vlaneseq
        %v1010 = vshrl.u32 %v1009, 7
        %v1011 = vsub.s32 0, %v1010
        %v1012 = vrot.slane %v1001, %v1011
        %v1013 = vadd.f32 %v1012, %v1007
        %v1014 = vadd.f32 %v1012, %v1008
        %v1015 = vmul.f32 %v999, %v1013
        %v1016 = vmul.f32 %v1000, %v1014
        %v1017 = vadd.f32 %v995, %v1015
        %v1018 = vadd.f32 %v996, %v1016
        %v1019 = vmul.f32 %v871, %v999
        %v1020 = vmul.f32 %v872, %v1000
        %v1021 = vsub.f32 %v1019, %v977
        %v1022 = vsub.f32 %v1020, %v978
        %v1023 = vld [vmem:[%s329 + $0x7] sm:$0x1]
        %v1024 = vld [vmem:[%s338 + $0x7] sm:$0x1]
        %v1025 = vlaneseq
        %v1026 = vshrl.u32 %v1025, 7
        %v1027 = vsub.s32 0, %v1026
        %v1028 = vrot.slane %v1024, %v1027
        %v1029 = vmul.f32 %v423, %v1028
        %v1030 = vmul.f32 %v424, %v1028
        %v1031 = vlaneseq
        %v1032 = vshrl.u32 %v1031, 7
        %v1033 = vsub.s32 0, %v1032
        %v1034 = vrot.slane %v1023, %v1033
        %v1035 = vadd.f32 %v1034, %v1029
        %v1036 = vadd.f32 %v1034, %v1030
        %v1037 = vmul.f32 %v1021, %v1035
        %v1038 = vmul.f32 %v1022, %v1036
        %v1039 = vadd.f32 %v1017, %v1037
        %v1040 = vadd.f32 %v1018, %v1038
        %vm1041 = vcmask 64512
        %1042 = vst.msk [vmem:[%s400] sm:$0xff] %vm1041, %v1039
        %1043 = vst.msk [vmem:[%s400 + $0x8] sm:$0xff] %vm1041, %v1040
        %p1044 = scmp.lt.s32.totalorder %s29, 1
        %s1045 = scalar_select %p1044, %s29, 1
        %p1046 = scmp.lt.s32.totalorder %s30, 0
        %s1047 = scalar_select %p1046, %s30, 0
        %s1048 = smul.addr %s1045, 2
        %s1049 = sadd.s32 %s1047, %s1048
        %s1050 = smul.addr %s1049, 8
        %s1051 = scalar_lea.vmem %s5, %s1050
        // Predicated region
        $region57: #{tpu_custom_call.1} parent=39 // pred_check
          %p1052 = pneg %p197
        $region58: #{tpu_custom_call.1} parent=39 // pred_check_branch
          %1054 = sbr.rel (%p1052) target = $region60
        $region59: #{tpu_custom_call.1} parent=39 // pred_region
          _
        $region60: #{tpu_custom_call.1} parent=39 // pred_fallthru
          _
      $region40: #{tpu_custom_call.1} parent=5 // pred_fallthru
        _
      %p1055 = scmp.le.s32.totalorder 2, %s20
      // Predicated region
      $region61: #{tpu_custom_call.1} parent=5 // pred_check
        %p1056 = pneg %p1055
      $region62: #{tpu_custom_call.1} parent=5 // pred_check_branch
        %1058 = sbr.rel (%p1056) target = $region64
      $region63: #{tpu_custom_call.1} parent=5 // pred_region
        %s1059 = ssub.s32 %s20, 2
        // Predicated region
        $region65: #{tpu_custom_call.1} parent=63 // pred_check
          %p1060 = pneg %p203
        $region66: #{tpu_custom_call.1} parent=63 // pred_check_branch
          %1062 = sbr.rel (%p1060) target = $region68
        $region67: #{tpu_custom_call.1} parent=63 // pred_region
          %p1063 = scmp.lt.s32.totalorder %s31, 1
          %s1064 = scalar_select %p1063, %s31, 1
          %p1065 = scmp.lt.s32.totalorder %s32, 0
          %s1066 = scalar_select %p1065, %s32, 0
          %s1067 = smul.addr %s1064, 2
          %s1068 = sadd.s32 %s1066, %s1067
          %s1069 = smul.addr %s1068, 8
          %s1070 = scalar_lea.vmem %s5, %s1069
        $region68: #{tpu_custom_call.1} parent=63 // pred_fallthru
          _
      $region64: #{tpu_custom_call.1} parent=5 // pred_fallthru
        _
    $region6: #{tpu_custom_call.1} parent=1 // loop_footer
      %s24 = sadd.s32 1, %s20
    $region7: #{tpu_custom_call.1} parent=1 // loop_footer_branch
      %19 = sbr.rel target = $region3
    $region8: #{tpu_custom_call.1} parent=1 // loop_exit
      _
    %1071 = vsyncpa [#allocation3], 1
    %s1072 = scalar_lea.sflag [#allocation3], 1
    %1073 = vsyncpa %s1072, 1
    %1074 = vsyncpa [#allocation5], 1
    %s1075 = scalar_lea.sflag [#allocation5], 1
    %1076 = vsyncpa %s1075, 1
    %1077 = vsyncpa [#allocation8], 1
    %s1078 = scalar_lea.sflag [#allocation8], 1
    %1079 = vsyncpa %s1078, 1

</llo_original>
